<compile_context>
chip_gen: v5e
topology: v5e:2x2
jax: 0.10.0
libtpu: 0.0.40
codegen_flags: <defaults>
</compile_context>

<pallas_src>
import jax
import jax.numpy as jnp
from jax.experimental import pallas as pl
from jax.experimental.pallas import tpu as pltpu


def _linear_kernel(x_ref, w_ref, b_ref, o_ref):
    # x_ref: (TM, K)  w_ref: (K, N)  b_ref: (1, N) f32  o_ref: (TM, N)
    acc = jnp.dot(x_ref[...], w_ref[...], preferred_element_type=jnp.float32)
    o_ref[...] = (acc + b_ref[...]).astype(o_ref.dtype)


def _round_up(x, m):
    return (x + m - 1) // m * m


def _round_down_pos(x, m):
    return max(m, (x // m) * m)


def iob2_tagging_forward(
    hidden_state,
    weight,
    bias,
    *,
    tm=8192,                       # sweep 8192..16384; cap below keeps VMEM safe
    compute_dtype=jnp.bfloat16,    # precision flag; set jnp.float32 to match PyTorch bit-for-bit-ish
    out_dtype=None,                # defaults to hidden_state.dtype (f32)
    vmem_budget_bytes=20 << 20,    # double-buffered x+out budget (lane-padded)
):
    """hidden_state: (B, S, H); weight: (O, H) (PyTorch Linear layout); bias: (O,)."""
    B, S, H = hidden_state.shape
    O = weight.shape[0]
    M, K, N = B * S, H, O

    if out_dtype is None:
        out_dtype = hidden_state.dtype

    x2d = hidden_state.reshape(M, K).astype(compute_dtype)
    w_t = weight.T.astype(compute_dtype)      # (K, N); tiny transpose, accepted per review
    b2d = bias.reshape(1, N).astype(jnp.float32)  # bias added in f32

    # ---- Row-tile selection with VMEM-aware cap (lane-padded, double-buffered). ----
    x_itemsize = jnp.dtype(compute_dtype).itemsize
    o_itemsize = jnp.dtype(out_dtype).itemsize
    lanes_x = _round_up(K, 128)
    lanes_o = _round_up(N, 128)
    per_row_vmem = 2 * (lanes_x * x_itemsize + lanes_o * o_itemsize)
    tm_cap = _round_down_pos(vmem_budget_bytes // per_row_vmem, 8)
    tm_eff = max(8, _round_down_pos(min(tm, tm_cap, _round_up(M, 8)), 8))
    grid_m = pl.cdiv(M, tm_eff)               # ragged last block handled by Pallas

    cost = pl.CostEstimate(
        flops=2 * M * K * N,
        transcendentals=0,
        bytes_accessed=(M * K * x_itemsize          # x read
                        + K * N * x_itemsize        # weight read
                        + M * N * o_itemsize        # output write
                        + N * 4),                   # bias read
    )

    out2d = pl.pallas_call(
        _linear_kernel,
        out_shape=jax.ShapeDtypeStruct((M, N), out_dtype),
        grid_spec=pltpu.PrefetchScalarGridSpec(
            num_scalar_prefetch=0,
            grid=(grid_m,),
            in_specs=[
                pl.BlockSpec((tm_eff, K), lambda i: (i, 0)),   # x rows march
                pl.BlockSpec((K, N), lambda i: (0, 0)),        # weight resident
                pl.BlockSpec((1, N), lambda i: (0, 0)),        # bias resident
            ],
            out_specs=pl.BlockSpec((tm_eff, N), lambda i: (i, 0)),
        ),
        compiler_params=pltpu.CompilerParams(
            dimension_semantics=("parallel",),      # shard M tiles across TCs (v7x)
            vmem_limit_bytes=32 << 20,              # raise v5e's 16 MiB scoped default
        ),
        cost_estimate=cost,
    )(x2d, w_t, b2d)

    return out2d.reshape(B, S, N)


def reference_forward(hidden_state, weight, bias):
    return jnp.einsum("bsh,oh->bso", hidden_state, weight) + bias


if __name__ == "__main__":
    # Small shapes consistent with the module: hidden_size=32, num_labels=5 -> out=15
    batch, seq, hidden_size, num_labels = 2, 8, 32, 5
    out_features = num_labels * 3

    key = jax.random.PRNGKey(0)
    k_x, k_w, k_b = jax.random.split(key, 3)

    hidden_state = jax.random.normal(k_x, (batch, seq, hidden_size), dtype=jnp.float32)
    # Deterministic init mimicking nn.Linear's uniform(-1/sqrt(in), 1/sqrt(in))
    bound = 1.0 / (hidden_size ** 0.5)
    weight = jax.random.uniform(k_w, (out_features, hidden_size),
                                minval=-bound, maxval=bound, dtype=jnp.float32)
    bias = jax.random.uniform(k_b, (out_features,),
                              minval=-bound, maxval=bound, dtype=jnp.float32)

    ref = reference_forward(hidden_state, weight, bias)

    # 1) Exact-precision path (matches the f32 PyTorch module).
    out_f32 = iob2_tagging_forward(hidden_state, weight, bias,
                                   compute_dtype=jnp.float32)
    out_f32 = jax.block_until_ready(out_f32)
    assert out_f32.shape == (batch, seq, out_features)
    assert jnp.allclose(out_f32, ref, atol=1e-5, rtol=1e-5), "f32 mismatch vs reference"

    # 2) Default bf16-compute path (f32 accumulate, f32 output) -> looser tolerance.
    out_bf16 = iob2_tagging_forward(hidden_state, weight, bias)
    out_bf16 = jax.block_until_ready(out_bf16)
    assert out_bf16.shape == (batch, seq, out_features)
    assert jnp.allclose(out_bf16, ref, atol=3e-2, rtol=3e-2), "bf16 mismatch vs reference"

    # 3) Ragged grid exercise: M = 21 rows with tm=8 -> grid of 3, masked tail writes.
    b2, s2 = 3, 7
    hs2 = jax.random.normal(jax.random.PRNGKey(1), (b2, s2, hidden_size), dtype=jnp.float32)
    ref2 = reference_forward(hs2, weight, bias)
    out2 = iob2_tagging_forward(hs2, weight, bias, tm=8, compute_dtype=jnp.float32)
    out2 = jax.block_until_ready(out2)
    assert out2.shape == (b2, s2, out_features)
    assert jnp.allclose(out2, ref2, atol=1e-5, rtol=1e-5), "ragged-grid mismatch vs reference"

    print("KERNEL_OK")
</pallas_src>

<mosaic_0001>
module attributes {stable_mosaic.version = 11 : i64} {
  func.func @_linear_kernel(%arg0: i32, %arg1: memref<16x32xf32, #tpu.memory_space<vmem>>, %arg2: memref<32x15xf32, #tpu.memory_space<vmem>>, %arg3: memref<1x15xf32, #tpu.memory_space<vmem>>, %arg4: memref<16x15xf32, #tpu.memory_space<vmem>>) attributes {dimension_semantics = [#tpu.dimension_semantics<parallel>], iteration_bounds = array<i64: 1>, scalar_prefetch = 0 : i64, scratch_operands = 0 : i64, tpu.core_type = #tpu.core_type<tc>, window_params = [{transform_indices = @transform_0, window_bounds = array<i64: 16, 32>}, {pipeline_mode = #tpu.pipeline_mode<synchronous>, transform_indices = @transform_1, window_bounds = array<i64: 32, 15>}, {pipeline_mode = #tpu.pipeline_mode<synchronous>, transform_indices = @transform_2, window_bounds = array<i64: 1, 15>}, {transform_indices = @transform_3, window_bounds = array<i64: 16, 15>}]} {
    %c0 = arith.constant 0 : index
    %c0_0 = arith.constant 0 : index
    %0 = vector.load %arg1[%c0, %c0_0] : memref<16x32xf32, #tpu.memory_space<vmem>>, vector<16x32xf32>
    %c0_1 = arith.constant 0 : index
    %c0_2 = arith.constant 0 : index
    %1 = vector.load %arg2[%c0_1, %c0_2] : memref<32x15xf32, #tpu.memory_space<vmem>>, vector<32x15xf32>
    %cst = arith.constant dense<0.000000e+00> : vector<16x15xf32>
    %2 = tpu.matmul %0, %1, %cst {dimension_numbers = #tpu.dot_dimension_numbers<[1], [0], [0], [1], [0, 0, 1, 1], [], []>} : vector<16x32xf32>, vector<32x15xf32>, vector<16x15xf32> -> vector<16x15xf32>
    %c0_3 = arith.constant 0 : index
    %c0_4 = arith.constant 0 : index
    %3 = vector.load %arg3[%c0_3, %c0_4] : memref<1x15xf32, #tpu.memory_space<vmem>>, vector<1x15xf32>
    %4 = vector.broadcast %3 : vector<1x15xf32> to vector<16x15xf32>
    %5 = arith.addf %2, %4 : vector<16x15xf32>
    %c0_5 = arith.constant 0 : index
    %c0_6 = arith.constant 0 : index
    %6 = vector.load %arg4[%c0_5, %c0_6] : memref<16x15xf32, #tpu.memory_space<vmem>>, vector<16x15xf32>
    tpu.vector_store %arg4[%c0_5, %c0_6], %5 {strides = array<i32>} : memref<16x15xf32, #tpu.memory_space<vmem>>, vector<16x15xf32>,
    return
  }
  func.func @transform_0(%arg0: i32) -> (i32, i32) {
    %c0_i32 = arith.constant 0 : i32
    %c0_i32_0 = arith.constant 0 : i32
    return %arg0, %c0_i32 : i32, i32
  }
  func.func @transform_1(%arg0: i32) -> (i32, i32) {
    %c0_i32 = arith.constant 0 : i32
    %c0_i32_0 = arith.constant 0 : i32
    %c0_i32_1 = arith.constant 0 : i32
    return %c0_i32, %c0_i32_0 : i32, i32
  }
  func.func @transform_2(%arg0: i32) -> (i32, i32) {
    %c0_i32 = arith.constant 0 : i32
    %c0_i32_0 = arith.constant 0 : i32
    %c0_i32_1 = arith.constant 0 : i32
    return %c0_i32, %c0_i32_0 : i32, i32
  }
  func.func @transform_3(%arg0: i32) -> (i32, i32) {
    %c0_i32 = arith.constant 0 : i32
    %c0_i32_0 = arith.constant 0 : i32
    return %arg0, %c0_i32 : i32, i32
  }
}

</mosaic_0001>

<llo_original>
// kernel: tpu_custom_call.1
$region0: #{tpu_custom_call.1}
  #allocation0 [shape = 'u32[]', space=smem, size = 0x4, offset = 0x4, fixed_abs, tag = 'smem constant byte address 0x4 - core index']
  #allocation1 [shape = 'u32[72,128]{1,0:T(1,128)}', space=vmem, size = 0x9000, scoped, tag = 'internal scratch']
  %s0 = inlined_call_operand.vmem [shape: f32[16,32], index: 0, kind: input, shape index: {}]
  %s1 = inlined_call_operand.vmem [shape: f32[32,15], index: 1, kind: input, shape index: {}]
  %s2 = inlined_call_operand.vmem [shape: f32[1,15], index: 2, kind: input, shape index: {}]
  %s3 = inlined_call_operand.hbm [shape: f32[16,15], index: 3, kind: output, shape index: {}]
  %s4 = sld [smem:[#allocation0]]
  $region22: #{tpu_custom_call.1} parent=0
    _
  %s6 = ssub.s32 1, %s4
  %s7 = scalar_select 0, %s6, %s4
  $region1: #{tpu_custom_call.1} parent=0
    #allocation2 [shape = 'u8[8192]{0}', space=vmem, size = 0x2000, scoped, tag = 'output window, operand 0, single buffered']
    #allocation3 [shape = 's32[1]{0}', space=sflag, size = 0x4, scoped, tag = 'scoped memory for tpu_custom_call.1']
    %8 = vsyncpa [#allocation3], 0
    // Predicated region
    $region2: #{tpu_custom_call.1} parent=1 // pred_check
      _
    $region3: #{tpu_custom_call.1} parent=1 // pred_check_branch
      %10 = sbr.rel (0) target = $region5
    $region4: #{tpu_custom_call.1} parent=1 // pred_region
      _
    $region5: #{tpu_custom_call.1} parent=1 // pred_fallthru
      _
    // Predicated region
    $region6: #{tpu_custom_call.1} parent=1 // pred_check
      _
    $region7: #{tpu_custom_call.1} parent=1 // pred_check_branch
      %12 = sbr.rel (0) target = $region9
    $region8: #{tpu_custom_call.1} parent=1 // pred_region
      _
    $region9: #{tpu_custom_call.1} parent=1 // pred_fallthru
      _
    // Predicated region
    $region10: #{tpu_custom_call.1} parent=1 // pred_check
      _
    $region11: #{tpu_custom_call.1} parent=1 // pred_check_branch
      %14 = sbr.rel (0) target = $region13
    $region12: #{tpu_custom_call.1} parent=1 // pred_region
      _
    $region13: #{tpu_custom_call.1} parent=1 // pred_fallthru
      _
    %v15 = vld [vmem:[%s0] sm:$0xff]
    %v16 = vld [vmem:[%s0 + $0x8] sm:$0xff]
    %v17 = vld [vmem:[%s1] sm:$0xff]
    %v18 = vld [vmem:[%s1 + $0x8] sm:$0xff]
    %v19 = vld [vmem:[%s1 + $0x10] sm:$0xff]
    %v20 = vld [vmem:[%s1 + $0x18] sm:$0xff]
    %v21 = vld [vmem:[%s2] sm:$0x1]
    %v23 = vperm.slane %v21, 0
    %vm25 = vcmask 261120
    %v27 = vsel %vm25, %v15, 0
    %v30 = vsel %vm25, %v16, 0
    %32 = vmatpush.msra.mxu0 0.0
    %33 = vmatpush.msra.mxu0 0.0
    %34 = vmatpush.msra.mxu0 0.0
    %35 = vmatpush.msra.mxu0 0.0
    %36 = vmatpush.msra.mxu0 0.0
    %37 = vmatpush.msra.mxu0 0.0
    %38 = vmatpush.msra.mxu0 0.0
    %39 = vmatpush.msra.mxu0 0.0
    %40 = vmatpush.msra.mxu0 0.0
    %41 = vmatpush.msra.mxu0 0.0
    %42 = vmatpush.msra.mxu0 0.0
    %43 = vmatpush.msra.mxu0 0.0
    %44 = vmatpush.msra.mxu0 %v20
    %45 = vmatpush.msra.mxu0 %v19
    %46 = vmatpush.msra.mxu0 %v18
    %47 = vmatpush.msra.mxu0 %v17
    %48 = vmatmul.f32.gmra.mxu0 %v27
    %v49 = vpop.f32.mrf.mxu0
    %v50 = vadd.f32 %v23, %v49
    %51 = vmatmul.f32.gmra.mxu0 %v30
    %v52 = vpop.f32.mrf.mxu0
    %v53 = vadd.f32 %v23, %v52
    %54 = vdwg.mxu0
    %vm55 = vcmask 121856
    %56 = vst.msk [vmem:[#allocation2] sm:$0xff] %vm55, %v50
    %57 = vst.msk [vmem:[#allocation2 + $0x8] sm:$0xff] %vm55, %v53
    // Predicated region
    $region14: #{tpu_custom_call.1} parent=1 // pred_check
      _
    $region15: #{tpu_custom_call.1} parent=1 // pred_check_branch
      %59 = sbr.rel (0) target = $region17
    $region16: #{tpu_custom_call.1} parent=1 // pred_region
      %61 = vsyncadd [#allocation3], 0
      %s62 = sshll.u32 [#allocation2], 4
      %s63 = int_to_ptr.vmem [resolvable:$true] %s62
      %s64 = sshll.u32 %s3, 4
      %s65 = int_to_ptr.hbm [resolvable:$true] %s64
      %70 = dma.vmem_to_hbm [thread:$0]  %s63, 256, %s65, [#allocation3], 128, 128, 8
    $region17: #{tpu_custom_call.1} parent=1 // pred_fallthru
      _
    // Predicated region
    $region18: #{tpu_custom_call.1} parent=1 // pred_check
      _
    $region19: #{tpu_custom_call.1} parent=1 // pred_check_branch
      %72 = sbr.rel (0) target = $region21
    $region20: #{tpu_custom_call.1} parent=1 // pred_region
      %74 = dma.done [#allocation3], 256
    $region21: #{tpu_custom_call.1} parent=1 // pred_fallthru
      _
    %75 = vsyncpa [#allocation3], 1

</llo_original>
